<compile_context>
chip_gen: v7x
topology: tpu7x:2x2x1
jax: 0.10.0
libtpu: 0.0.40
codegen_flags: <defaults>
</compile_context>

<pallas_src>
import functools

import jax
import jax.numpy as jnp
from jax import lax
from jax.experimental import pallas as pl
from jax.experimental.pallas import tpu as pltpu

_LANE = 128


def _round_up(x, m):
    return (x + m - 1) // m * m


def _cdiv(a, b):
    return (a + b - 1) // b


def _sublane_pack(dtype):
    # Sub-32-bit dtypes pack along sublanes: 8 rows f32, 16 bf16, 32 int8/fp8.
    itemsize = jnp.dtype(dtype).itemsize
    return max(8, 32 // max(itemsize, 1))


def _vmem_capacity_bytes():
    # Generation-aware physical VMEM per TensorCore; conservative fallback.
    try:
        info = pltpu.get_tpu_info()
        cap = getattr(info, "vmem_capacity_bytes", None)
        if cap:
            return int(cap)
    except Exception:
        pass
    return 64 << 20  # v7x-sized fallback; safe on every generation.


def _vmem_limit(need_bytes, cap_bytes):
    # Headroom for Mosaic internal scratch / semaphores; never request more
    # than ~85% of physical VMEM (important on v7x's 64 MiB).
    hard_cap = int(cap_bytes * 0.85)
    want = max(int(need_bytes * 1.5) + (4 << 20), 32 << 20)
    return int(min(want, hard_cap))


def _rotate_kernel_resident(x_ref, w_ref, o_ref, *, precision):
    # One grid step: (tm, n) tile of x times the full resident (n, n) rotation
    # matrix. The cast to the weight dtype is fused here (no extra HBM pass).
    o_ref[...] = jnp.dot(
        x_ref[...].astype(w_ref.dtype),
        w_ref[...],
        preferred_element_type=jnp.float32,
        precision=precision,
    ).astype(o_ref.dtype)


def _rotate_kernel_tiled(x_ref, w_ref, o_ref, acc_ref, *, precision):
    # K-tiled matmul with an f32 accumulator: init on first k, emit on last k.
    @pl.when(pl.program_id(2) == 0)
    def _():
        acc_ref[...] = jnp.zeros_like(acc_ref)

    acc_ref[...] += jnp.dot(
        x_ref[...].astype(w_ref.dtype),
        w_ref[...],
        preferred_element_type=jnp.float32,
        precision=precision,
    )

    @pl.when(pl.program_id(2) == pl.num_programs(2) - 1)
    def _():
        o_ref[...] = acc_ref[...].astype(o_ref.dtype)


def rotate_layer(x, weight, *, tm=None, resident_budget_bytes=None,
                 precision=None, allow_bypass=True):
    """Apply y = x @ weight (x cast to weight.dtype) with a Pallas TPU kernel.

    x: array of shape (..., n); weight: (n, n). Returns (..., n) in
    weight.dtype, matching torch: x.to(weight.dtype) @ weight.
    """
    n = weight.shape[0]
    assert weight.shape == (n, n), weight.shape
    assert x.shape[-1] == n, (x.shape, n)

    out_dtype = weight.dtype
    lead_shape = x.shape[:-1]
    x2d = x.reshape(-1, n)
    M = x2d.shape[0]

    x_bytes = jnp.dtype(x2d.dtype).itemsize
    w_bytes = jnp.dtype(weight.dtype).itemsize
    o_bytes = jnp.dtype(out_dtype).itemsize

    if precision is None and jnp.dtype(weight.dtype) == jnp.float32:
        # Closer parity with torch's f32 matmul; free for a memory-bound op.
        precision = lax.Precision.HIGHEST

    # Small-problem bypass: launch + single grid step costs more than XLA's
    # fused dot for tiny inputs.
    if allow_bypass and M * n * max(x_bytes, o_bytes) <= (256 << 10):
        out = jnp.matmul(x2d.astype(weight.dtype), weight, precision=precision)
        return out.reshape(*lead_shape, n)

    cap = _vmem_capacity_bytes()
    resident_budget = (int(cap * 0.70) if resident_budget_bytes is None
                       else int(resident_budget_bytes))

    pack = max(_sublane_pack(x2d.dtype), _sublane_pack(out_dtype))

    cost = pl.CostEstimate(
        flops=2 * M * n * n,
        transcendentals=0,
        bytes_accessed=M * n * x_bytes + n * n * w_bytes + M * n * o_bytes,
    )

    weight_vmem = n * n * w_bytes
    per_row_vmem = 2 * n * (x_bytes + o_bytes)  # double-buffered x + out rows
    rows_cap = ((resident_budget - weight_vmem) // per_row_vmem
                if resident_budget > weight_vmem else 0)

    if rows_cap >= min(M, 256):
        # ---- fast path: weight resident in VMEM, 1-D grid over M ----
        if tm is not None:
            tm_eff = max(pack, _round_up(int(tm), pack))
        else:
            # ~4 MiB x tile, clamped to [512, 4096], multiple of 512.
            tm_eff = ((4 << 20) // max(n * x_bytes, 1)) // 512 * 512
            tm_eff = min(4096, max(512, tm_eff))
        tm_eff = min(tm_eff, max(pack, (rows_cap // pack) * pack))
        if M <= tm_eff:
            # >= 2 parallel steps when M is big enough so both v7x TCs get work.
            tm_eff = _round_up(_cdiv(M, 2), pack) if M >= 1024 else M
        grid_m = _cdiv(M, tm_eff)

        resident_vmem = 2 * tm_eff * n * (x_bytes + o_bytes) + weight_vmem
        kernel = functools.partial(_rotate_kernel_resident, precision=precision)
        out = pl.pallas_call(
            kernel,
            out_shape=jax.ShapeDtypeStruct((M, n), out_dtype),
            grid_spec=pltpu.PrefetchScalarGridSpec(
                num_scalar_prefetch=0,
                grid=(grid_m,),
                in_specs=[
                    pl.BlockSpec((tm_eff, n), lambda i: (i, 0)),
                    # Constant block index: DMA'd once; single-buffered to
                    # halve its VMEM footprint.
                    pl.BlockSpec((n, n), lambda i: (0, 0),
                                 pipeline_mode=pl.Buffered(1)),
                ],
                out_specs=pl.BlockSpec((tm_eff, n), lambda i: (i, 0)),
            ),
            compiler_params=pltpu.CompilerParams(
                dimension_semantics=("parallel",),
                vmem_limit_bytes=_vmem_limit(resident_vmem, cap),
            ),
            cost_estimate=cost,
        )(x2d, weight)
        return out.reshape(*lead_shape, n)

    # ---- fallback: weight too big to sit resident -> M/N/K-tiled matmul ----
    def _pick(cands, length):
        for c in cands:
            if length % c == 0:
                return c
        return None

    n_eff, x_t, w_t = n, x2d, weight
    tk = _pick((512, 256, 128), n_eff)
    if tk is None:
        # Rare: huge n that is not a multiple of 128. The contraction dim must
        # be fully in-bounds or explicitly zero-padded, never implicitly.
        n_eff = _round_up(n, _LANE)
        x_t = jnp.pad(x2d, ((0, 0), (0, n_eff - n)))
        w_t = jnp.pad(weight, ((0, n_eff - n), (0, n_eff - n)))
        tk = _pick((512, 256, 128), n_eff)
    tn = _pick((1024, 512, 256, 128), n_eff)

    tm_t = int(tm) if tm is not None else 1024
    if M <= tm_t:
        tm_t = M
    else:
        tm_t = max(pack, (tm_t // pack) * pack)
    grid = (_cdiv(M, tm_t), n_eff // tn, n_eff // tk)

    tiled_vmem = (2 * tm_t * tk * x_bytes + 2 * tk * tn * w_bytes
                  + 2 * tm_t * tn * o_bytes + tm_t * tn * 4)
    kernel = functools.partial(_rotate_kernel_tiled, precision=precision)
    out = pl.pallas_call(
        kernel,
        out_shape=jax.ShapeDtypeStruct((M, n_eff), out_dtype),
        grid_spec=pltpu.PrefetchScalarGridSpec(
            num_scalar_prefetch=0,
            grid=grid,
            in_specs=[
                pl.BlockSpec((tm_t, tk), lambda i, j, k: (i, k)),
                pl.BlockSpec((tk, tn), lambda i, j, k: (k, j)),
            ],
            out_specs=pl.BlockSpec((tm_t, tn), lambda i, j, k: (i, j)),
            scratch_shapes=[pltpu.VMEM((tm_t, tn), jnp.float32)],
        ),
        compiler_params=pltpu.CompilerParams(
            dimension_semantics=("parallel", "parallel", "arbitrary"),
            vmem_limit_bytes=_vmem_limit(tiled_vmem, cap),
        ),
        cost_estimate=cost,
    )(x_t, w_t)
    if n_eff != n:
        out = out[:, :n]
    return out.reshape(*lead_shape, n)


def make_orthogonal_weight(key, n, dtype=jnp.float32):
    """Deterministic orthogonal init (equivalent to torch.nn.init.orthogonal_)."""
    a = jax.random.normal(key, (n, n), dtype=jnp.float32)
    q, r = jnp.linalg.qr(a)
    d = jnp.sign(jnp.diagonal(r))
    d = jnp.where(d == 0, 1.0, d)  # guard: never zero out a column
    q = q * d[None, :]
    return q.astype(dtype)


if __name__ == "__main__":
    key = jax.random.PRNGKey(0)
    k_w, k_x, k_w2, k_x2, k_x3, k_w4, k_x4 = jax.random.split(key, 7)
    hp = lax.Precision.HIGHEST

    # 1) Primary RotateLayer shape: n=128, x = (batch=2, seq=8, 128). Force the
    #    pallas path (the default wrapper routes this tiny problem to XLA).
    n = 128
    batch, seq = 2, 8
    weight = make_orthogonal_weight(k_w, n, dtype=jnp.float32)
    x = jax.random.normal(k_x, (batch, seq, n), dtype=jnp.float32)
    y = jax.block_until_ready(rotate_layer(x, weight, allow_bypass=False))
    y_ref = jnp.matmul(x, weight, precision=hp)
    assert y.shape == (batch, seq, n)
    assert jnp.allclose(y, y_ref, atol=1e-3, rtol=1e-3)

    # 2) n not a multiple of 128 and a ragged M: exercises full-array-dim
    #    blocks (no wrapper-side padding anywhere).
    n2, m2 = 96, 10
    w2 = make_orthogonal_weight(k_w2, n2, dtype=jnp.float32)
    x2 = jax.random.normal(k_x2, (m2, n2), dtype=jnp.float32)
    y2 = jax.block_until_ready(rotate_layer(x2, w2, allow_bypass=False))
    y2_ref = jnp.matmul(x2, w2, precision=hp)
    assert y2.shape == (m2, n2)
    assert jnp.allclose(y2, y2_ref, atol=1e-3, rtol=1e-3)

    # 3) Masked partial last M block: M=520 with tm=256 -> grid cdiv=3, the
    #    last block's out-of-bounds rows are dropped by Pallas.
    m3 = 520
    x3 = jax.random.normal(k_x3, (m3, n), dtype=jnp.float32)
    y3 = jax.block_until_ready(rotate_layer(x3, weight, tm=256,
                                            allow_bypass=False))
    y3_ref = jnp.matmul(x3, weight, precision=hp)
    assert y3.shape == (m3, n)
    assert jnp.allclose(y3, y3_ref, atol=1e-3, rtol=1e-3)

    # 4) Tiled-weight fallback (forced with a zero resident budget) exercises
    #    the large-n / small-VMEM code path at a small shape.
    n4, m4 = 512, 256
    w4 = make_orthogonal_weight(k_w4, n4, dtype=jnp.float32)
    x4 = jax.random.normal(k_x4, (m4, n4), dtype=jnp.float32)
    y4 = jax.block_until_ready(rotate_layer(x4, w4, resident_budget_bytes=0,
                                            allow_bypass=False))
    y4_ref = jnp.matmul(x4, w4, precision=hp)
    assert jnp.allclose(y4, y4_ref, atol=1e-3, rtol=1e-3)

    # 5) Default dispatch on the tiny primary shape hits the XLA bypass.
    y5 = jax.block_until_ready(rotate_layer(x, weight))
    assert jnp.allclose(y5, y_ref, atol=1e-3, rtol=1e-3)

    print("KERNEL_OK")
</pallas_src>

<mosaic_0001>
module attributes {stable_mosaic.version = 11 : i64} {
  func.func @_rotate_kernel_resident(%arg0: i32, %arg1: memref<16x128xf32, #tpu.memory_space<vmem>>, %arg2: memref<128x128xf32, #tpu.memory_space<vmem>>, %arg3: memref<16x128xf32, #tpu.memory_space<vmem>>) attributes {dimension_semantics = [#tpu.dimension_semantics<parallel>], iteration_bounds = array<i64: 1>, scalar_prefetch = 0 : i64, scratch_operands = 0 : i64, tpu.core_type = #tpu.core_type<tc>, window_params = [{transform_indices = @transform_0, window_bounds = array<i64: 16, 128>}, {pipeline_mode = #tpu.pipeline_mode<synchronous>, transform_indices = @transform_1, window_bounds = array<i64: 128, 128>}, {transform_indices = @transform_2, window_bounds = array<i64: 16, 128>}]} {
    %c0 = arith.constant 0 : index
    %c0_0 = arith.constant 0 : index
    %0 = vector.load %arg1[%c0, %c0_0] : memref<16x128xf32, #tpu.memory_space<vmem>>, vector<16x128xf32>
    %c0_1 = arith.constant 0 : index
    %c0_2 = arith.constant 0 : index
    %1 = vector.load %arg2[%c0_1, %c0_2] : memref<128x128xf32, #tpu.memory_space<vmem>>, vector<128x128xf32>
    %cst = arith.constant dense<0.000000e+00> : vector<16x128xf32>
    %2 = tpu.matmul %0, %1, %cst {dimension_numbers = #tpu.dot_dimension_numbers<[1], [0], [0], [1], [0, 0, 1, 1], [], []>, precision = #tpu.contract_precision<fp32>} : vector<16x128xf32>, vector<128x128xf32>, vector<16x128xf32> -> vector<16x128xf32>
    %c0_3 = arith.constant 0 : index
    %c0_4 = arith.constant 0 : index
    %3 = vector.load %arg3[%c0_3, %c0_4] : memref<16x128xf32, #tpu.memory_space<vmem>>, vector<16x128xf32>
    tpu.vector_store %arg3[%c0_3, %c0_4], %2 {strides = array<i32>} : memref<16x128xf32, #tpu.memory_space<vmem>>, vector<16x128xf32>,
    return
  }
  func.func @transform_0(%arg0: i32) -> (i32, i32) {
    %c0_i32 = arith.constant 0 : i32
    %c0_i32_0 = arith.constant 0 : i32
    return %arg0, %c0_i32 : i32, i32
  }
  func.func @transform_1(%arg0: i32) -> (i32, i32) {
    %c0_i32 = arith.constant 0 : i32
    %c0_i32_0 = arith.constant 0 : i32
    %c0_i32_1 = arith.constant 0 : i32
    return %c0_i32, %c0_i32_0 : i32, i32
  }
  func.func @transform_2(%arg0: i32) -> (i32, i32) {
    %c0_i32 = arith.constant 0 : i32
    %c0_i32_0 = arith.constant 0 : i32
    return %arg0, %c0_i32 : i32, i32
  }
}

</mosaic_0001>

<llo_original>
// kernel: tpu_custom_call.1
$region0: #{tpu_custom_call.1}
  #allocation0 [shape = 'u32[]', space=smem, size = 0x4, offset = 0x4, fixed_abs, tag = 'smem constant byte address 0x4 - core index']
  #allocation1 [shape = 'u32[144,128]{1,0:T(1,128)}', space=vmem, size = 0x12000, scoped, tag = 'internal scratch']
  %s0 = inlined_call_operand.hbm [shape: f32[16,128], index: 0, kind: input, shape index: {}]
  %s1 = inlined_call_operand.hbm [shape: f32[128,128], index: 1, kind: input, shape index: {}]
  %s2 = inlined_call_operand.hbm [shape: f32[16,128], index: 2, kind: output, shape index: {}]
  %s3 = sld [smem:[#allocation0]]
  $region26: #{tpu_custom_call.1} parent=0
    _
  %s5 = ssub.s32 1, %s3
  %s6 = scalar_select 0, %s5, %s3
  $region1: #{tpu_custom_call.1} parent=0
    #allocation2 [shape = 'u8[8192]{0}', space=vmem, size = 0x2000, scoped, tag = 'input window, operand 0, single buffered']
    #allocation3 [shape = 's32[1]{0}', space=sflag, size = 0x4, scoped, tag = 'scoped memory for tpu_custom_call.1']
    #allocation4 [shape = 's32[1]{0}', space=sflag, size = 0x4, scoped, tag = 'scoped memory for tpu_custom_call.1']
    #allocation5 [shape = 'u8[65536]{0}', space=vmem, size = 0x10000, scoped, tag = 'input window, operand 1, single buffered']
    #allocation6 [shape = 's32[1]{0}', space=sflag, size = 0x4, scoped, tag = 'scoped memory for tpu_custom_call.1']
    #allocation7 [shape = 'u8[8192]{0}', space=vmem, size = 0x2000, scoped, tag = 'output window, operand 0, single buffered']
    %7 = vsyncpa [#allocation3], 0
    %8 = vsyncpa [#allocation6], 0
    %9 = vsyncpa [#allocation4], 0
    // Predicated region
    $region2: #{tpu_custom_call.1} parent=1 // pred_check
      _
    $region3: #{tpu_custom_call.1} parent=1 // pred_check_branch
      %11 = sbr.rel (0) target = $region5
    $region4: #{tpu_custom_call.1} parent=1 // pred_region
      %s13 = ssub.s32 256, 256
      %14 = vsyncadd [#allocation3], %s13
      %s15 = sshll.u32 [#allocation2], 4
      %s16 = int_to_ptr.vmem [resolvable:$true] %s15
      %21 = dma.hbm_to_vmem [thread:$0]  %s0, 256, %s16, [#allocation3], 128, 128, 8
    $region5: #{tpu_custom_call.1} parent=1 // pred_fallthru
      _
    // Predicated region
    $region6: #{tpu_custom_call.1} parent=1 // pred_check
      _
    $region7: #{tpu_custom_call.1} parent=1 // pred_check_branch
      %23 = sbr.rel (0) target = $region9
    $region8: #{tpu_custom_call.1} parent=1 // pred_region
      %s25 = ssub.s32 2048, 2048
      %26 = vsyncadd [#allocation6], %s25
      %s27 = sshll.u32 [#allocation5], 4
      %s28 = int_to_ptr.vmem [resolvable:$true] %s27
      %33 = dma.hbm_to_vmem [thread:$0]  %s1, 2048, %s28, [#allocation6], 128, 128, 8
    $region9: #{tpu_custom_call.1} parent=1 // pred_fallthru
      _
    // Predicated region
    $region10: #{tpu_custom_call.1} parent=1 // pred_check
      _
    $region11: #{tpu_custom_call.1} parent=1 // pred_check_branch
      %35 = sbr.rel (0) target = $region13
    $region12: #{tpu_custom_call.1} parent=1 // pred_region
      %36 = dma.done [#allocation3], 256
    $region13: #{tpu_custom_call.1} parent=1 // pred_fallthru
      _
    // Predicated region
    $region14: #{tpu_custom_call.1} parent=1 // pred_check
      _
    $region15: #{tpu_custom_call.1} parent=1 // pred_check_branch
      %38 = sbr.rel (0) target = $region17
    $region16: #{tpu_custom_call.1} parent=1 // pred_region
      %39 = dma.done [#allocation6], 2048
    $region17: #{tpu_custom_call.1} parent=1 // pred_fallthru
      _
    %v40 = vld [vmem:[#allocation2] sm:$0xff]
    %v41 = vld [vmem:[#allocation2 + $0x8] sm:$0xff]
    %v42 = vld [vmem:[#allocation5] sm:$0xff]
    %v43 = vld [vmem:[#allocation5 + $0x8] sm:$0xff]
    %v44 = vld [vmem:[#allocation5 + $0x10] sm:$0xff]
    %v45 = vld [vmem:[#allocation5 + $0x18] sm:$0xff]
    %v46 = vld [vmem:[#allocation5 + $0x20] sm:$0xff]
    %v47 = vld [vmem:[#allocation5 + $0x28] sm:$0xff]
    %v48 = vld [vmem:[#allocation5 + $0x30] sm:$0xff]
    %v49 = vld [vmem:[#allocation5 + $0x38] sm:$0xff]
    %v50 = vld [vmem:[#allocation5 + $0x40] sm:$0xff]
    %v51 = vld [vmem:[#allocation5 + $0x48] sm:$0xff]
    %v52 = vld [vmem:[#allocation5 + $0x50] sm:$0xff]
    %v53 = vld [vmem:[#allocation5 + $0x58] sm:$0xff]
    %v54 = vld [vmem:[#allocation5 + $0x60] sm:$0xff]
    %v55 = vld [vmem:[#allocation5 + $0x68] sm:$0xff]
    %v56 = vld [vmem:[#allocation5 + $0x70] sm:$0xff]
    %v57 = vld [vmem:[#allocation5 + $0x78] sm:$0xff]
    %58 = vmatprep.subr.mxu0 0.0
    %v59 = vand.u32 %v42, 4294901760
    %60 = vmatpush1.msra.mxu0 %v59
    %61 = vmatprep.subr.mxu0 0.0
    %v62 = vand.u32 %v43, 4294901760
    %63 = vmatpush1.msra.mxu0 %v62
    %64 = vmatprep.subr.mxu0 0.0
    %v65 = vand.u32 %v44, 4294901760
    %66 = vmatpush1.msra.mxu0 %v65
    %67 = vmatprep.subr.mxu0 0.0
    %v68 = vand.u32 %v45, 4294901760
    %69 = vmatpush1.msra.mxu0 %v68
    %70 = vmatprep.subr.mxu0 0.0
    %v71 = vand.u32 %v46, 4294901760
    %72 = vmatpush1.msra.mxu0 %v71
    %73 = vmatprep.subr.mxu0 0.0
    %v74 = vand.u32 %v47, 4294901760
    %75 = vmatpush1.msra.mxu0 %v74
    %76 = vmatprep.subr.mxu0 0.0
    %v77 = vand.u32 %v48, 4294901760
    %78 = vmatpush1.msra.mxu0 %v77
    %79 = vmatprep.subr.mxu0 0.0
    %v80 = vand.u32 %v49, 4294901760
    %81 = vmatpush1.msra.mxu0 %v80
    %82 = vmatprep.subr.mxu0 0.0
    %v83 = vand.u32 %v50, 4294901760
    %84 = vmatpush1.msra.mxu0 %v83
    %85 = vmatprep.subr.mxu0 0.0
    %v86 = vand.u32 %v51, 4294901760
    %87 = vmatpush1.msra.mxu0 %v86
    %88 = vmatprep.subr.mxu0 0.0
    %v89 = vand.u32 %v52, 4294901760
    %90 = vmatpush1.msra.mxu0 %v89
    %91 = vmatprep.subr.mxu0 0.0
    %v92 = vand.u32 %v53, 4294901760
    %93 = vmatpush1.msra.mxu0 %v92
    %94 = vmatprep.subr.mxu0 0.0
    %v95 = vand.u32 %v54, 4294901760
    %96 = vmatpush1.msra.mxu0 %v95
    %97 = vmatprep.subr.mxu0 0.0
    %v98 = vand.u32 %v55, 4294901760
    %99 = vmatpush1.msra.mxu0 %v98
    %100 = vmatprep.subr.mxu0 0.0
    %v101 = vand.u32 %v56, 4294901760
    %102 = vmatpush1.msra.mxu0 %v101
    %103 = vmatprep.subr.mxu0 0.0
    %v104 = vand.u32 %v57, 4294901760
    %105 = vmatpush1.msra.mxu0 %v104
    %106 = vmatprep.subr.mxu0 0.0
    %107 = vmatpush1.msra.mxu0 0.0
    %108 = vmatprep.subr.mxu0 0.0
    %109 = vmatpush1.msra.mxu0 0.0
    %110 = vmatprep.subr.mxu0 0.0
    %111 = vmatpush1.msra.mxu0 0.0
    %112 = vmatprep.subr.mxu0 0.0
    %113 = vmatpush1.msra.mxu0 0.0
    %114 = vmatprep.subr.mxu0 0.0
    %115 = vmatpush1.msra.mxu0 0.0
    %116 = vmatprep.subr.mxu0 0.0
    %117 = vmatpush1.msra.mxu0 0.0
    %118 = vmatprep.subr.mxu0 0.0
    %119 = vmatpush1.msra.mxu0 0.0
    %120 = vmatprep.subr.mxu0 0.0
    %121 = vmatpush1.msra.mxu0 0.0
    %122 = vmatprep.subr.mxu0 0.0
    %123 = vmatpush1.msra.mxu0 0.0
    %124 = vmatprep.subr.mxu0 0.0
    %125 = vmatpush1.msra.mxu0 0.0
    %126 = vmatprep.subr.mxu0 0.0
    %127 = vmatpush1.msra.mxu0 0.0
    %128 = vmatprep.subr.mxu0 0.0
    %129 = vmatpush1.msra.mxu0 0.0
    %130 = vmatprep.subr.mxu0 0.0
    %131 = vmatpush1.msra.mxu0 0.0
    %132 = vmatprep.subr.mxu0 0.0
    %133 = vmatpush1.msra.mxu0 0.0
    %134 = vmatprep.subr.mxu0 0.0
    %135 = vmatpush1.msra.mxu0 0.0
    %136 = vmatprep.subr.mxu0 0.0
    %137 = vmatpush1.msra.mxu0 0.0
    %138 = vmatprep.mubr.f32.mxu0 0.0
    %v139 = vand.u32 %v40, 4294901760
    %v140 = vsub.f32 %v40, %v139
    %v141 = vand.u32 %v140, 4294901760
    %v142 = vsub.f32 %v140, %v141
    %v143 = vand.u32 %v142, 4294901760
    %144 = vmatmul.mubr.f32.gmra.mrb[0].mxu0 %v143
    %v145 = vpop.f32.mrb[0].mxu0
    %v146 = vadd.f32 0.0, %v145
    %v147 = vpop.f32.mrb[0].mxu0
    %148 = vmatprep.mubr.f32.mxu0 0.0
    %v149 = vand.u32 %v41, 4294901760
    %v150 = vsub.f32 %v41, %v149
    %v151 = vand.u32 %v150, 4294901760
    %v152 = vsub.f32 %v150, %v151
    %v153 = vand.u32 %v152, 4294901760
    %154 = vmatmul.mubr.f32.gmra.mrb[0].mxu0 %v153
    %v155 = vpop.f32.mrb[0].mxu0
    %v156 = vadd.f32 0.0, %v155
    %v157 = vpop.f32.mrb[0].mxu0
    %158 = vdwg.mxu0
    %159 = vmatprep.subr.mxu0 0.0
    %v160 = vand.u32 %v42, 4294901760
    %v161 = vsub.f32 %v42, %v160
    %v162 = vand.u32 %v161, 4294901760
    %v163 = vsub.f32 %v161, %v162
    %v164 = vand.u32 %v163, 4294901760
    %165 = vmatpush1.msra.mxu0 %v164
    %166 = vmatprep.subr.mxu0 0.0
    %v167 = vand.u32 %v43, 4294901760
    %v168 = vsub.f32 %v43, %v167
    %v169 = vand.u32 %v168, 4294901760
    %v170 = vsub.f32 %v168, %v169
    %v171 = vand.u32 %v170, 4294901760
    %172 = vmatpush1.msra.mxu0 %v171
    %173 = vmatprep.subr.mxu0 0.0
    %v174 = vand.u32 %v44, 4294901760
    %v175 = vsub.f32 %v44, %v174
    %v176 = vand.u32 %v175, 4294901760
    %v177 = vsub.f32 %v175, %v176
    %v178 = vand.u32 %v177, 4294901760
    %179 = vmatpush1.msra.mxu0 %v178
    %180 = vmatprep.subr.mxu0 0.0
    %v181 = vand.u32 %v45, 4294901760
    %v182 = vsub.f32 %v45, %v181
    %v183 = vand.u32 %v182, 4294901760
    %v184 = vsub.f32 %v182, %v183
    %v185 = vand.u32 %v184, 4294901760
    %186 = vmatpush1.msra.mxu0 %v185
    %187 = vmatprep.subr.mxu0 0.0
    %v188 = vand.u32 %v46, 4294901760
    %v189 = vsub.f32 %v46, %v188
    %v190 = vand.u32 %v189, 4294901760
    %v191 = vsub.f32 %v189, %v190
    %v192 = vand.u32 %v191, 4294901760
    %193 = vmatpush1.msra.mxu0 %v192
    %194 = vmatprep.subr.mxu0 0.0
    %v195 = vand.u32 %v47, 4294901760
    %v196 = vsub.f32 %v47, %v195
    %v197 = vand.u32 %v196, 4294901760
    %v198 = vsub.f32 %v196, %v197
    %v199 = vand.u32 %v198, 4294901760
    %200 = vmatpush1.msra.mxu0 %v199
    %201 = vmatprep.subr.mxu0 0.0
    %v202 = vand.u32 %v48, 4294901760
    %v203 = vsub.f32 %v48, %v202
    %v204 = vand.u32 %v203, 4294901760
    %v205 = vsub.f32 %v203, %v204
    %v206 = vand.u32 %v205, 4294901760
    %207 = vmatpush1.msra.mxu0 %v206
    %208 = vmatprep.subr.mxu0 0.0
    %v209 = vand.u32 %v49, 4294901760
    %v210 = vsub.f32 %v49, %v209
    %v211 = vand.u32 %v210, 4294901760
    %v212 = vsub.f32 %v210, %v211
    %v213 = vand.u32 %v212, 4294901760
    %214 = vmatpush1.msra.mxu0 %v213
    %215 = vmatprep.subr.mxu0 0.0
    %v216 = vand.u32 %v50, 4294901760
    %v217 = vsub.f32 %v50, %v216
    %v218 = vand.u32 %v217, 4294901760
    %v219 = vsub.f32 %v217, %v218
    %v220 = vand.u32 %v219, 4294901760
    %221 = vmatpush1.msra.mxu0 %v220
    %222 = vmatprep.subr.mxu0 0.0
    %v223 = vand.u32 %v51, 4294901760
    %v224 = vsub.f32 %v51, %v223
    %v225 = vand.u32 %v224, 4294901760
    %v226 = vsub.f32 %v224, %v225
    %v227 = vand.u32 %v226, 4294901760
    %228 = vmatpush1.msra.mxu0 %v227
    %229 = vmatprep.subr.mxu0 0.0
    %v230 = vand.u32 %v52, 4294901760
    %v231 = vsub.f32 %v52, %v230
    %v232 = vand.u32 %v231, 4294901760
    %v233 = vsub.f32 %v231, %v232
    %v234 = vand.u32 %v233, 4294901760
    %235 = vmatpush1.msra.mxu0 %v234
    %236 = vmatprep.subr.mxu0 0.0
    %v237 = vand.u32 %v53, 4294901760
    %v238 = vsub.f32 %v53, %v237
    %v239 = vand.u32 %v238, 4294901760
    %v240 = vsub.f32 %v238, %v239
    %v241 = vand.u32 %v240, 4294901760
    %242 = vmatpush1.msra.mxu0 %v241
    %243 = vmatprep.subr.mxu0 0.0
    %v244 = vand.u32 %v54, 4294901760
    %v245 = vsub.f32 %v54, %v244
    %v246 = vand.u32 %v245, 4294901760
    %v247 = vsub.f32 %v245, %v246
    %v248 = vand.u32 %v247, 4294901760
    %249 = vmatpush1.msra.mxu0 %v248
    %250 = vmatprep.subr.mxu0 0.0
    %v251 = vand.u32 %v55, 4294901760
    %v252 = vsub.f32 %v55, %v251
    %v253 = vand.u32 %v252, 4294901760
    %v254 = vsub.f32 %v252, %v253
    %v255 = vand.u32 %v254, 4294901760
    %256 = vmatpush1.msra.mxu0 %v255
    %257 = vmatprep.subr.mxu0 0.0
    %v258 = vand.u32 %v56, 4294901760
    %v259 = vsub.f32 %v56, %v258
    %v260 = vand.u32 %v259, 4294901760
    %v261 = vsub.f32 %v259, %v260
    %v262 = vand.u32 %v261, 4294901760
    %263 = vmatpush1.msra.mxu0 %v262
    %264 = vmatprep.subr.mxu0 0.0
    %v265 = vand.u32 %v57, 4294901760
    %v266 = vsub.f32 %v57, %v265
    %v267 = vand.u32 %v266, 4294901760
    %v268 = vsub.f32 %v266, %v267
    %v269 = vand.u32 %v268, 4294901760
    %270 = vmatpush1.msra.mxu0 %v269
    %271 = vmatprep.subr.mxu0 0.0
    %272 = vmatpush1.msra.mxu0 0.0
    %273 = vmatprep.subr.mxu0 0.0
    %274 = vmatpush1.msra.mxu0 0.0
    %275 = vmatprep.subr.mxu0 0.0
    %276 = vmatpush1.msra.mxu0 0.0
    %277 = vmatprep.subr.mxu0 0.0
    %278 = vmatpush1.msra.mxu0 0.0
    %279 = vmatprep.subr.mxu0 0.0
    %280 = vmatpush1.msra.mxu0 0.0
    %281 = vmatprep.subr.mxu0 0.0
    %282 = vmatpush1.msra.mxu0 0.0
    %283 = vmatprep.subr.mxu0 0.0
    %284 = vmatpush1.msra.mxu0 0.0
    %285 = vmatprep.subr.mxu0 0.0
    %286 = vmatpush1.msra.mxu0 0.0
    %287 = vmatprep.subr.mxu0 0.0
    %288 = vmatpush1.msra.mxu0 0.0
    %289 = vmatprep.subr.mxu0 0.0
    %290 = vmatpush1.msra.mxu0 0.0
    %291 = vmatprep.subr.mxu0 0.0
    %292 = vmatpush1.msra.mxu0 0.0
    %293 = vmatprep.subr.mxu0 0.0
    %294 = vmatpush1.msra.mxu0 0.0
    %295 = vmatprep.subr.mxu0 0.0
    %296 = vmatpush1.msra.mxu0 0.0
    %297 = vmatprep.subr.mxu0 0.0
    %298 = vmatpush1.msra.mxu0 0.0
    %299 = vmatprep.subr.mxu0 0.0
    %300 = vmatpush1.msra.mxu0 0.0
    %301 = vmatprep.subr.mxu0 0.0
    %302 = vmatpush1.msra.mxu0 0.0
    %303 = vmatprep.mubr.f32.mxu0 0.0
    %v304 = vand.u32 %v40, 4294901760
    %305 = vmatmul.mubr.f32.gmra.mrb[0].mxu0 %v304
    %v306 = vpop.f32.mrb[0].mxu0
    %v307 = vadd.f32 %v146, %v306
    %v308 = vpop.f32.mrb[0].mxu0
    %309 = vmatprep.mubr.f32.mxu0 0.0
    %v310 = vand.u32 %v41, 4294901760
    %311 = vmatmul.mubr.f32.gmra.mrb[0].mxu0 %v310
    %v312 = vpop.f32.mrb[0].mxu0
    %v313 = vadd.f32 %v156, %v312
    %v314 = vpop.f32.mrb[0].mxu0
    %315 = vdwg.mxu0
    %316 = vmatprep.subr.mxu0 0.0
    %v317 = vand.u32 %v42, 4294901760
    %v318 = vsub.f32 %v42, %v317
    %319 = vmatpush1.msra.mxu0 %v318
    %320 = vmatprep.subr.mxu0 0.0
    %v321 = vand.u32 %v43, 4294901760
    %v322 = vsub.f32 %v43, %v321
    %323 = vmatpush1.msra.mxu0 %v322
    %324 = vmatprep.subr.mxu0 0.0
    %v325 = vand.u32 %v44, 4294901760
    %v326 = vsub.f32 %v44, %v325
    %327 = vmatpush1.msra.mxu0 %v326
    %328 = vmatprep.subr.mxu0 0.0
    %v329 = vand.u32 %v45, 4294901760
    %v330 = vsub.f32 %v45, %v329
    %331 = vmatpush1.msra.mxu0 %v330
    %332 = vmatprep.subr.mxu0 0.0
    %v333 = vand.u32 %v46, 4294901760
    %v334 = vsub.f32 %v46, %v333
    %335 = vmatpush1.msra.mxu0 %v334
    %336 = vmatprep.subr.mxu0 0.0
    %v337 = vand.u32 %v47, 4294901760
    %v338 = vsub.f32 %v47, %v337
    %339 = vmatpush1.msra.mxu0 %v338
    %340 = vmatprep.subr.mxu0 0.0
    %v341 = vand.u32 %v48, 4294901760
    %v342 = vsub.f32 %v48, %v341
    %343 = vmatpush1.msra.mxu0 %v342
    %344 = vmatprep.subr.mxu0 0.0
    %v345 = vand.u32 %v49, 4294901760
    %v346 = vsub.f32 %v49, %v345
    %347 = vmatpush1.msra.mxu0 %v346
    %348 = vmatprep.subr.mxu0 0.0
    %v349 = vand.u32 %v50, 4294901760
    %v350 = vsub.f32 %v50, %v349
    %351 = vmatpush1.msra.mxu0 %v350
    %352 = vmatprep.subr.mxu0 0.0
    %v353 = vand.u32 %v51, 4294901760
    %v354 = vsub.f32 %v51, %v353
    %355 = vmatpush1.msra.mxu0 %v354
    %356 = vmatprep.subr.mxu0 0.0
    %v357 = vand.u32 %v52, 4294901760
    %v358 = vsub.f32 %v52, %v357
    %359 = vmatpush1.msra.mxu0 %v358
    %360 = vmatprep.subr.mxu0 0.0
    %v361 = vand.u32 %v53, 4294901760
    %v362 = vsub.f32 %v53, %v361
    %363 = vmatpush1.msra.mxu0 %v362
    %364 = vmatprep.subr.mxu0 0.0
    %v365 = vand.u32 %v54, 4294901760
    %v366 = vsub.f32 %v54, %v365
    %367 = vmatpush1.msra.mxu0 %v366
    %368 = vmatprep.subr.mxu0 0.0
    %v369 = vand.u32 %v55, 4294901760
    %v370 = vsub.f32 %v55, %v369
    %371 = vmatpush1.msra.mxu0 %v370
    %372 = vmatprep.subr.mxu0 0.0
    %v373 = vand.u32 %v56, 4294901760
    %v374 = vsub.f32 %v56, %v373
    %375 = vmatpush1.msra.mxu0 %v374
    %376 = vmatprep.subr.mxu0 0.0
    %v377 = vand.u32 %v57, 4294901760
    %v378 = vsub.f32 %v57, %v377
    %379 = vmatpush1.msra.mxu0 %v378
    %380 = vmatprep.subr.mxu0 0.0
    %381 = vmatpush1.msra.mxu0 0.0
    %382 = vmatprep.subr.mxu0 0.0
    %383 = vmatpush1.msra.mxu0 0.0
    %384 = vmatprep.subr.mxu0 0.0
    %385 = vmatpush1.msra.mxu0 0.0
    %386 = vmatprep.subr.mxu0 0.0
    %387 = vmatpush1.msra.mxu0 0.0
    %388 = vmatprep.subr.mxu0 0.0
    %389 = vmatpush1.msra.mxu0 0.0
    %390 = vmatprep.subr.mxu0 0.0
    %391 = vmatpush1.msra.mxu0 0.0
    %392 = vmatprep.subr.mxu0 0.0
    %393 = vmatpush1.msra.mxu0 0.0
    %394 = vmatprep.subr.mxu0 0.0
    %395 = vmatpush1.msra.mxu0 0.0
    %396 = vmatprep.subr.mxu0 0.0
    %397 = vmatpush1.msra.mxu0 0.0
    %398 = vmatprep.subr.mxu0 0.0
    %399 = vmatpush1.msra.mxu0 0.0
    %400 = vmatprep.subr.mxu0 0.0
    %401 = vmatpush1.msra.mxu0 0.0
    %402 = vmatprep.subr.mxu0 0.0
    %403 = vmatpush1.msra.mxu0 0.0
    %404 = vmatprep.subr.mxu0 0.0
    %405 = vmatpush1.msra.mxu0 0.0
    %406 = vmatprep.subr.mxu0 0.0
    %407 = vmatpush1.msra.mxu0 0.0
    %408 = vmatprep.subr.mxu0 0.0
    %409 = vmatpush1.msra.mxu0 0.0
    %410 = vmatprep.subr.mxu0 0.0
    %411 = vmatpush1.msra.mxu0 0.0
    %412 = vmatprep.mubr.f32.mxu0 0.0
    %v413 = vand.u32 %v40, 4294901760
    %v414 = vsub.f32 %v40, %v413
    %415 = vmatmul.mubr.f32.gmra.mrb[0].mxu0 %v414
    %v416 = vpop.f32.mrb[0].mxu0
    %v417 = vadd.f32 %v307, %v416
    %v418 = vpop.f32.mrb[0].mxu0
    %419 = vmatprep.mubr.f32.mxu0 0.0
    %v420 = vand.u32 %v41, 4294901760
    %v421 = vsub.f32 %v41, %v420
    %422 = vmatmul.mubr.f32.gmra.mrb[0].mxu0 %v421
    %v423 = vpop.f32.mrb[0].mxu0
    %v424 = vadd.f32 %v313, %v423
    %v425 = vpop.f32.mrb[0].mxu0
    %426 = vdwg.mxu0
    %427 = vmatprep.subr.mxu0 0.0
    %v428 = vand.u32 %v42, 4294901760
    %429 = vmatpush1.msra.mxu0 %v428
    %430 = vmatprep.subr.mxu0 0.0
    %v431 = vand.u32 %v43, 4294901760
    %432 = vmatpush1.msra.mxu0 %v431
    %433 = vmatprep.subr.mxu0 0.0
    %v434 = vand.u32 %v44, 4294901760
    %435 = vmatpush1.msra.mxu0 %v434
    %436 = vmatprep.subr.mxu0 0.0
    %v437 = vand.u32 %v45, 4294901760
    %438 = vmatpush1.msra.mxu0 %v437
    %439 = vmatprep.subr.mxu0 0.0
    %v440 = vand.u32 %v46, 4294901760
    %441 = vmatpush1.msra.mxu0 %v440
    %442 = vmatprep.subr.mxu0 0.0
    %v443 = vand.u32 %v47, 4294901760
    %444 = vmatpush1.msra.mxu0 %v443
    %445 = vmatprep.subr.mxu0 0.0
    %v446 = vand.u32 %v48, 4294901760
    %447 = vmatpush1.msra.mxu0 %v446
    %448 = vmatprep.subr.mxu0 0.0
    %v449 = vand.u32 %v49, 4294901760
    %450 = vmatpush1.msra.mxu0 %v449
    %451 = vmatprep.subr.mxu0 0.0
    %v452 = vand.u32 %v50, 4294901760
    %453 = vmatpush1.msra.mxu0 %v452
    %454 = vmatprep.subr.mxu0 0.0
    %v455 = vand.u32 %v51, 4294901760
    %456 = vmatpush1.msra.mxu0 %v455
    %457 = vmatprep.subr.mxu0 0.0
    %v458 = vand.u32 %v52, 4294901760
    %459 = vmatpush1.msra.mxu0 %v458
    %460 = vmatprep.subr.mxu0 0.0
    %v461 = vand.u32 %v53, 4294901760
    %462 = vmatpush1.msra.mxu0 %v461
    %463 = vmatprep.subr.mxu0 0.0
    %v464 = vand.u32 %v54, 4294901760
    %465 = vmatpush1.msra.mxu0 %v464
    %466 = vmatprep.subr.mxu0 0.0
    %v467 = vand.u32 %v55, 4294901760
    %468 = vmatpush1.msra.mxu0 %v467
    %469 = vmatprep.subr.mxu0 0.0
    %v470 = vand.u32 %v56, 4294901760
    %471 = vmatpush1.msra.mxu0 %v470
    %472 = vmatprep.subr.mxu0 0.0
    %v473 = vand.u32 %v57, 4294901760
    %474 = vmatpush1.msra.mxu0 %v473
    %475 = vmatprep.subr.mxu0 0.0
    %476 = vmatpush1.msra.mxu0 0.0
    %477 = vmatprep.subr.mxu0 0.0
    %478 = vmatpush1.msra.mxu0 0.0
    %479 = vmatprep.subr.mxu0 0.0
    %480 = vmatpush1.msra.mxu0 0.0
    %481 = vmatprep.subr.mxu0 0.0
    %482 = vmatpush1.msra.mxu0 0.0
    %483 = vmatprep.subr.mxu0 0.0
    %484 = vmatpush1.msra.mxu0 0.0
    %485 = vmatprep.subr.mxu0 0.0
    %486 = vmatpush1.msra.mxu0 0.0
    %487 = vmatprep.subr.mxu0 0.0
    %488 = vmatpush1.msra.mxu0 0.0
    %489 = vmatprep.subr.mxu0 0.0
    %490 = vmatpush1.msra.mxu0 0.0
    %491 = vmatprep.subr.mxu0 0.0
    %492 = vmatpush1.msra.mxu0 0.0
    %493 = vmatprep.subr.mxu0 0.0
    %494 = vmatpush1.msra.mxu0 0.0
    %495 = vmatprep.subr.mxu0 0.0
    %496 = vmatpush1.msra.mxu0 0.0
    %497 = vmatprep.subr.mxu0 0.0
    %498 = vmatpush1.msra.mxu0 0.0
    %499 = vmatprep.subr.mxu0 0.0
    %500 = vmatpush1.msra.mxu0 0.0
    %501 = vmatprep.subr.mxu0 0.0
    %502 = vmatpush1.msra.mxu0 0.0
    %503 = vmatprep.subr.mxu0 0.0
    %504 = vmatpush1.msra.mxu0 0.0
    %505 = vmatprep.subr.mxu0 0.0
    %506 = vmatpush1.msra.mxu0 0.0
    %507 = vmatprep.mubr.f32.mxu0 0.0
    %v508 = vand.u32 %v40, 4294901760
    %v509 = vsub.f32 %v40, %v508
    %v510 = vand.u32 %v509, 4294901760
    %511 = vmatmul.mubr.f32.gmra.mrb[0].mxu0 %v510
    %v512 = vpop.f32.mrb[0].mxu0
    %v513 = vadd.f32 %v417, %v512
    %v514 = vpop.f32.mrb[0].mxu0
    %515 = vmatprep.mubr.f32.mxu0 0.0
    %v516 = vand.u32 %v41, 4294901760
    %v517 = vsub.f32 %v41, %v516
    %v518 = vand.u32 %v517, 4294901760
    %519 = vmatmul.mubr.f32.gmra.mrb[0].mxu0 %v518
    %v520 = vpop.f32.mrb[0].mxu0
    %v521 = vadd.f32 %v424, %v520
    %v522 = vpop.f32.mrb[0].mxu0
    %523 = vdwg.mxu0
    %524 = vmatprep.subr.mxu0 0.0
    %v525 = vand.u32 %v42, 4294901760
    %v526 = vsub.f32 %v42, %v525
    %v527 = vand.u32 %v526, 4294901760
    %528 = vmatpush1.msra.mxu0 %v527
    %529 = vmatprep.subr.mxu0 0.0
    %v530 = vand.u32 %v43, 4294901760
    %v531 = vsub.f32 %v43, %v530
    %v532 = vand.u32 %v531, 4294901760
    %533 = vmatpush1.msra.mxu0 %v532
    %534 = vmatprep.subr.mxu0 0.0
    %v535 = vand.u32 %v44, 4294901760
    %v536 = vsub.f32 %v44, %v535
    %v537 = vand.u32 %v536, 4294901760
    %538 = vmatpush1.msra.mxu0 %v537
    %539 = vmatprep.subr.mxu0 0.0
    %v540 = vand.u32 %v45, 4294901760
    %v541 = vsub.f32 %v45, %v540
    %v542 = vand.u32 %v541, 4294901760
    %543 = vmatpush1.msra.mxu0 %v542
    %544 = vmatprep.subr.mxu0 0.0
    %v545 = vand.u32 %v46, 4294901760
    %v546 = vsub.f32 %v46, %v545
    %v547 = vand.u32 %v546, 4294901760
    %548 = vmatpush1.msra.mxu0 %v547
    %549 = vmatprep.subr.mxu0 0.0
    %v550 = vand.u32 %v47, 4294901760
    %v551 = vsub.f32 %v47, %v550
    %v552 = vand.u32 %v551, 4294901760
    %553 = vmatpush1.msra.mxu0 %v552
    %554 = vmatprep.subr.mxu0 0.0
    %v555 = vand.u32 %v48, 4294901760
    %v556 = vsub.f32 %v48, %v555
    %v557 = vand.u32 %v556, 4294901760
    %558 = vmatpush1.msra.mxu0 %v557
    %559 = vmatprep.subr.mxu0 0.0
    %v560 = vand.u32 %v49, 4294901760
    %v561 = vsub.f32 %v49, %v560
    %v562 = vand.u32 %v561, 4294901760
    %563 = vmatpush1.msra.mxu0 %v562
    %564 = vmatprep.subr.mxu0 0.0
    %v565 = vand.u32 %v50, 4294901760
    %v566 = vsub.f32 %v50, %v565
    %v567 = vand.u32 %v566, 4294901760
    %568 = vmatpush1.msra.mxu0 %v567
    %569 = vmatprep.subr.mxu0 0.0
    %v570 = vand.u32 %v51, 4294901760
    %v571 = vsub.f32 %v51, %v570
    %v572 = vand.u32 %v571, 4294901760
    %573 = vmatpush1.msra.mxu0 %v572
    %574 = vmatprep.subr.mxu0 0.0
    %v575 = vand.u32 %v52, 4294901760
    %v576 = vsub.f32 %v52, %v575
    %v577 = vand.u32 %v576, 4294901760
    %578 = vmatpush1.msra.mxu0 %v577
    %579 = vmatprep.subr.mxu0 0.0
    %v580 = vand.u32 %v53, 4294901760
    %v581 = vsub.f32 %v53, %v580
    %v582 = vand.u32 %v581, 4294901760
    %583 = vmatpush1.msra.mxu0 %v582
    %584 = vmatprep.subr.mxu0 0.0
    %v585 = vand.u32 %v54, 4294901760
    %v586 = vsub.f32 %v54, %v585
    %v587 = vand.u32 %v586, 4294901760
    %588 = vmatpush1.msra.mxu0 %v587
    %589 = vmatprep.subr.mxu0 0.0
    %v590 = vand.u32 %v55, 4294901760
    %v591 = vsub.f32 %v55, %v590
    %v592 = vand.u32 %v591, 4294901760
    %593 = vmatpush1.msra.mxu0 %v592
    %594 = vmatprep.subr.mxu0 0.0
    %v595 = vand.u32 %v56, 4294901760
    %v596 = vsub.f32 %v56, %v595
    %v597 = vand.u32 %v596, 4294901760
    %598 = vmatpush1.msra.mxu0 %v597
    %599 = vmatprep.subr.mxu0 0.0
    %v600 = vand.u32 %v57, 4294901760
    %v601 = vsub.f32 %v57, %v600
    %v602 = vand.u32 %v601, 4294901760
    %603 = vmatpush1.msra.mxu0 %v602
    %604 = vmatprep.subr.mxu0 0.0
    %605 = vmatpush1.msra.mxu0 0.0
    %606 = vmatprep.subr.mxu0 0.0
    %607 = vmatpush1.msra.mxu0 0.0
    %608 = vmatprep.subr.mxu0 0.0
    %609 = vmatpush1.msra.mxu0 0.0
    %610 = vmatprep.subr.mxu0 0.0
    %611 = vmatpush1.msra.mxu0 0.0
    %612 = vmatprep.subr.mxu0 0.0
    %613 = vmatpush1.msra.mxu0 0.0
    %614 = vmatprep.subr.mxu0 0.0
    %615 = vmatpush1.msra.mxu0 0.0
    %616 = vmatprep.subr.mxu0 0.0
    %617 = vmatpush1.msra.mxu0 0.0
    %618 = vmatprep.subr.mxu0 0.0
    %619 = vmatpush1.msra.mxu0 0.0
    %620 = vmatprep.subr.mxu0 0.0
    %621 = vmatpush1.msra.mxu0 0.0
    %622 = vmatprep.subr.mxu0 0.0
    %623 = vmatpush1.msra.mxu0 0.0
    %624 = vmatprep.subr.mxu0 0.0
    %625 = vmatpush1.msra.mxu0 0.0
    %626 = vmatprep.subr.mxu0 0.0
    %627 = vmatpush1.msra.mxu0 0.0
    %628 = vmatprep.subr.mxu0 0.0
    %629 = vmatpush1.msra.mxu0 0.0
    %630 = vmatprep.subr.mxu0 0.0
    %631 = vmatpush1.msra.mxu0 0.0
    %632 = vmatprep.subr.mxu0 0.0
    %633 = vmatpush1.msra.mxu0 0.0
    %634 = vmatprep.subr.mxu0 0.0
    %635 = vmatpush1.msra.mxu0 0.0
    %636 = vmatprep.mubr.f32.mxu0 0.0
    %v637 = vand.u32 %v40, 4294901760
    %638 = vmatmul.mubr.f32.gmra.mrb[0].mxu0 %v637
    %v639 = vpop.f32.mrb[0].mxu0
    %v640 = vadd.f32 %v513, %v639
    %v641 = vpop.f32.mrb[0].mxu0
    %642 = vmatprep.mubr.f32.mxu0 0.0
    %v643 = vand.u32 %v41, 4294901760
    %644 = vmatmul.mubr.f32.gmra.mrb[0].mxu0 %v643
    %v645 = vpop.f32.mrb[0].mxu0
    %v646 = vadd.f32 %v521, %v645
    %v647 = vpop.f32.mrb[0].mxu0
    %648 = vdwg.mxu0
    %649 = vmatprep.subr.mxu0 0.0
    %v650 = vand.u32 %v42, 4294901760
    %651 = vmatpush1.msra.mxu0 %v650
    %652 = vmatprep.subr.mxu0 0.0
    %v653 = vand.u32 %v43, 4294901760
    %654 = vmatpush1.msra.mxu0 %v653
    %655 = vmatprep.subr.mxu0 0.0
    %v656 = vand.u32 %v44, 4294901760
    %657 = vmatpush1.msra.mxu0 %v656
    %658 = vmatprep.subr.mxu0 0.0
    %v659 = vand.u32 %v45, 4294901760
    %660 = vmatpush1.msra.mxu0 %v659
    %661 = vmatprep.subr.mxu0 0.0
    %v662 = vand.u32 %v46, 4294901760
    %663 = vmatpush1.msra.mxu0 %v662
    %664 = vmatprep.subr.mxu0 0.0
    %v665 = vand.u32 %v47, 4294901760
    %666 = vmatpush1.msra.mxu0 %v665
    %667 = vmatprep.subr.mxu0 0.0
    %v668 = vand.u32 %v48, 4294901760
    %669 = vmatpush1.msra.mxu0 %v668
    %670 = vmatprep.subr.mxu0 0.0
    %v671 = vand.u32 %v49, 4294901760
    %672 = vmatpush1.msra.mxu0 %v671
    %673 = vmatprep.subr.mxu0 0.0
    %v674 = vand.u32 %v50, 4294901760
    %675 = vmatpush1.msra.mxu0 %v674
    %676 = vmatprep.subr.mxu0 0.0
    %v677 = vand.u32 %v51, 4294901760
    %678 = vmatpush1.msra.mxu0 %v677
    %679 = vmatprep.subr.mxu0 0.0
    %v680 = vand.u32 %v52, 4294901760
    %681 = vmatpush1.msra.mxu0 %v680
    %682 = vmatprep.subr.mxu0 0.0
    %v683 = vand.u32 %v53, 4294901760
    %684 = vmatpush1.msra.mxu0 %v683
    %685 = vmatprep.subr.mxu0 0.0
    %v686 = vand.u32 %v54, 4294901760
    %687 = vmatpush1.msra.mxu0 %v686
    %688 = vmatprep.subr.mxu0 0.0
    %v689 = vand.u32 %v55, 4294901760
    %690 = vmatpush1.msra.mxu0 %v689
    %691 = vmatprep.subr.mxu0 0.0
    %v692 = vand.u32 %v56, 4294901760
    %693 = vmatpush1.msra.mxu0 %v692
    %694 = vmatprep.subr.mxu0 0.0
    %v695 = vand.u32 %v57, 4294901760
    %696 = vmatpush1.msra.mxu0 %v695
    %697 = vmatprep.subr.mxu0 0.0
    %698 = vmatpush1.msra.mxu0 0.0
    %699 = vmatprep.subr.mxu0 0.0
    %700 = vmatpush1.msra.mxu0 0.0
    %701 = vmatprep.subr.mxu0 0.0
    %702 = vmatpush1.msra.mxu0 0.0
    %703 = vmatprep.subr.mxu0 0.0
    %704 = vmatpush1.msra.mxu0 0.0
    %705 = vmatprep.subr.mxu0 0.0
    %706 = vmatpush1.msra.mxu0 0.0
    %707 = vmatprep.subr.mxu0 0.0
    %708 = vmatpush1.msra.mxu0 0.0
    %709 = vmatprep.subr.mxu0 0.0
    %710 = vmatpush1.msra.mxu0 0.0
    %711 = vmatprep.subr.mxu0 0.0
    %712 = vmatpush1.msra.mxu0 0.0
    %713 = vmatprep.subr.mxu0 0.0
    %714 = vmatpush1.msra.mxu0 0.0
    %715 = vmatprep.subr.mxu0 0.0
    %716 = vmatpush1.msra.mxu0 0.0
    %717 = vmatprep.subr.mxu0 0.0
    %718 = vmatpush1.msra.mxu0 0.0
    %719 = vmatprep.subr.mxu0 0.0
    %720 = vmatpush1.msra.mxu0 0.0
    %721 = vmatprep.subr.mxu0 0.0
    %722 = vmatpush1.msra.mxu0 0.0
    %723 = vmatprep.subr.mxu0 0.0
    %724 = vmatpush1.msra.mxu0 0.0
    %725 = vmatprep.subr.mxu0 0.0
    %726 = vmatpush1.msra.mxu0 0.0
    %727 = vmatprep.subr.mxu0 0.0
    %728 = vmatpush1.msra.mxu0 0.0
    %729 = vmatprep.mubr.f32.mxu0 0.0
    %v730 = vand.u32 %v40, 4294901760
    %731 = vmatmul.mubr.f32.gmra.mrb[0].mxu0 %v730
    %v732 = vpop.f32.mrb[0].mxu0
    %v733 = vadd.f32 %v640, %v732
    %v734 = vpop.f32.mrb[0].mxu0
    %735 = vmatprep.mubr.f32.mxu0 0.0
    %v736 = vand.u32 %v41, 4294901760
    %737 = vmatmul.mubr.f32.gmra.mrb[0].mxu0 %v736
    %v738 = vpop.f32.mrb[0].mxu0
    %v739 = vadd.f32 %v646, %v738
    %v740 = vpop.f32.mrb[0].mxu0
    %741 = vdwg.mxu0
    %742 = vst [vmem:[#allocation7] sm:$0xff] %v733
    %743 = vst [vmem:[#allocation7 + $0x8] sm:$0xff] %v739
    // Predicated region
    $region18: #{tpu_custom_call.1} parent=1 // pred_check
      _
    $region19: #{tpu_custom_call.1} parent=1 // pred_check_branch
      %745 = sbr.rel (0) target = $region21
    $region20: #{tpu_custom_call.1} parent=1 // pred_region
      %s747 = ssub.s32 256, 256
      %748 = vsyncadd [#allocation4], %s747
      %s749 = sshll.u32 [#allocation7], 4
      %s750 = int_to_ptr.vmem [resolvable:$true] %s749
      %755 = dma.vmem_to_hbm [thread:$0]  %s750, 256, %s2, [#allocation4], 128, 128, 8
    $region21: #{tpu_custom_call.1} parent=1 // pred_fallthru
      _
    // Predicated region
    $region22: #{tpu_custom_call.1} parent=1 // pred_check
      _
    $region23: #{tpu_custom_call.1} parent=1 // pred_check_branch
      %757 = sbr.rel (0) target = $region25
    $region24: #{tpu_custom_call.1} parent=1 // pred_region
      %758 = dma.done [#allocation4], 256
    $region25: #{tpu_custom_call.1} parent=1 // pred_fallthru
      _
    %759 = vsyncpa [#allocation3], 1
    %760 = vsyncpa [#allocation6], 1
    %761 = vsyncpa [#allocation4], 1

</llo_original>
